<compile_context>
chip_gen: v7x
topology: tpu7x:2x2x1
jax: 0.10.0
libtpu: 0.0.40
codegen_flags: <defaults>
</compile_context>

<pallas_src>
import jax
import jax.numpy as jnp
from jax.experimental import pallas as pl
from jax.experimental.pallas import tpu as pltpu


IN_F, HID_F, OUT_F = 5, 10, 2      # logical sizes (match nn.Linear(5,10), Linear(10,2))
IN_P, HID_P = 8, 16                # sublane-padded contraction sizes


def qnetwork_kernel(xT_ref, w1T_ref, b1_ref, w2T_ref, b2_ref, oT_ref):
    # fc1 (transposed): (HID_P, IN_P) @ (IN_P, TB) -> (HID_P, TB)
    h = jnp.dot(w1T_ref[...], xT_ref[...], preferred_element_type=jnp.float32)
    h = jnp.maximum(h + b1_ref[...], 0.0)          # bias broadcast over lanes + ReLU
    # fc2 (transposed): (OUT_F, HID_P) @ (HID_P, TB) -> (OUT_F, TB)
    out = jnp.dot(w2T_ref[...], h, preferred_element_type=jnp.float32)
    oT_ref[...] = (out + b2_ref[...]).astype(oT_ref.dtype)


def _round_up(a, m):
    return (a + m - 1) // m * m


def qnetwork_forward(x, w1, b1, w2, b2, *, tb=1024):
    """Forward pass of QNetwork.

    x:  (B, 5) f32
    w1: (5, 10), b1: (10,)   -- fc1 (stored as (in, out), i.e. x @ w1 + b1)
    w2: (10, 2), b2: (2,)    -- fc2
    returns (B, 2) f32
    """
    B = x.shape[0]

    # Pick a lane-tile size: multiple of 128; large tiles for big batches,
    # a single tile for small ones.
    if B <= tb:
        TB = _round_up(max(B, 1), 128)
    else:
        TB = tb
    Bp = _round_up(B, TB)

    # Host-side pad + transpose (zeros in padded rows/cols are exact no-ops).
    xT = jnp.zeros((IN_P, Bp), jnp.float32).at[:IN_F, :B].set(x.T)
    w1T = jnp.zeros((HID_P, IN_P), jnp.float32).at[:HID_F, :IN_F].set(w1.T)
    b1p = jnp.zeros((HID_P, 1), jnp.float32).at[:HID_F, 0].set(b1.reshape(-1))
    w2T = jnp.zeros((OUT_F, HID_P), jnp.float32).at[:, :HID_F].set(w2.T)
    b2p = b2.reshape(OUT_F, 1).astype(jnp.float32)

    grid = (Bp // TB,)

    oT = pl.pallas_call(
        qnetwork_kernel,
        out_shape=jax.ShapeDtypeStruct((OUT_F, Bp), jnp.float32),
        grid_spec=pltpu.PrefetchScalarGridSpec(
            num_scalar_prefetch=0,
            grid=grid,
            in_specs=[
                # x^T: tile the lane (batch) axis.
                pl.BlockSpec((IN_P, TB), lambda i: (0, i)),
                # Weights / biases: full blocks, constant index_map -> VMEM-resident.
                pl.BlockSpec((HID_P, IN_P), lambda i: (0, 0)),
                pl.BlockSpec((HID_P, 1), lambda i: (0, 0)),
                pl.BlockSpec((OUT_F, HID_P), lambda i: (0, 0)),
                pl.BlockSpec((OUT_F, 1), lambda i: (0, 0)),
            ],
            out_specs=pl.BlockSpec((OUT_F, TB), lambda i: (0, i)),
        ),
        compiler_params=pltpu.CompilerParams(
            dimension_semantics=("parallel",),   # megacore sharding on v7x
        ),
    )(xT, w1T, b1p, w2T, b2p)

    # Strip padding and transpose back to PyTorch's (B, out_features) layout.
    return oT[:, :B].T


def init_params(key):
    """Deterministic init mirroring nn.Linear default: U(-1/sqrt(fan_in), +1/sqrt(fan_in))."""
    k1, k2, k3, k4 = jax.random.split(key, 4)
    bnd1 = 1.0 / jnp.sqrt(IN_F)
    bnd2 = 1.0 / jnp.sqrt(HID_F)
    # stored as (in, out) so the reference computes x @ W + b
    w1 = jax.random.uniform(k1, (IN_F, HID_F), jnp.float32, -bnd1, bnd1)
    b1 = jax.random.uniform(k2, (HID_F,), jnp.float32, -bnd1, bnd1)
    w2 = jax.random.uniform(k3, (HID_F, OUT_F), jnp.float32, -bnd2, bnd2)
    b2 = jax.random.uniform(k4, (OUT_F,), jnp.float32, -bnd2, bnd2)
    return w1, b1, w2, b2


if __name__ == "__main__":
    key = jax.random.PRNGKey(0)
    kx, kp = jax.random.split(key)

    B = 8  # small batch for the check
    x = jax.random.normal(kx, (B, IN_F), dtype=jnp.float32)
    w1, b1, w2, b2 = init_params(kp)

    out = qnetwork_forward(x, w1, b1, w2, b2)
    out = jax.block_until_ready(out)

    # reference check in plain JAX
    ref = jnp.maximum(x @ w1 + b1, 0.0) @ w2 + b2
    assert out.shape == (B, OUT_F)
    assert jnp.allclose(out, ref, atol=1e-5, rtol=1e-5)

    print("KERNEL_OK")
</pallas_src>

<mosaic_0001>
module attributes {stable_mosaic.version = 11 : i64} {
  func.func @qnetwork_kernel(%arg0: i32, %arg1: memref<8x128xf32, #tpu.memory_space<vmem>>, %arg2: memref<16x8xf32, #tpu.memory_space<vmem>>, %arg3: memref<16x1xf32, #tpu.memory_space<vmem>>, %arg4: memref<2x16xf32, #tpu.memory_space<vmem>>, %arg5: memref<2x1xf32, #tpu.memory_space<vmem>>, %arg6: memref<2x128xf32, #tpu.memory_space<vmem>>) attributes {dimension_semantics = [#tpu.dimension_semantics<parallel>], iteration_bounds = array<i64: 1>, scalar_prefetch = 0 : i64, scratch_operands = 0 : i64, tpu.core_type = #tpu.core_type<tc>, window_params = [{transform_indices = @transform_0, window_bounds = array<i64: 8, 128>}, {pipeline_mode = #tpu.pipeline_mode<synchronous>, transform_indices = @transform_1, window_bounds = array<i64: 16, 8>}, {pipeline_mode = #tpu.pipeline_mode<synchronous>, transform_indices = @transform_2, window_bounds = array<i64: 16, 1>}, {pipeline_mode = #tpu.pipeline_mode<synchronous>, transform_indices = @transform_3, window_bounds = array<i64: 2, 16>}, {pipeline_mode = #tpu.pipeline_mode<synchronous>, transform_indices = @transform_4, window_bounds = array<i64: 2, 1>}, {transform_indices = @transform_5, window_bounds = array<i64: 2, 128>}]} {
    %c0 = arith.constant 0 : index
    %c0_0 = arith.constant 0 : index
    %0 = vector.load %arg2[%c0, %c0_0] : memref<16x8xf32, #tpu.memory_space<vmem>>, vector<16x8xf32>
    %c0_1 = arith.constant 0 : index
    %c0_2 = arith.constant 0 : index
    %1 = vector.load %arg1[%c0_1, %c0_2] : memref<8x128xf32, #tpu.memory_space<vmem>>, vector<8x128xf32>
    %cst = arith.constant dense<0.000000e+00> : vector<16x128xf32>
    %2 = tpu.matmul %0, %1, %cst {dimension_numbers = #tpu.dot_dimension_numbers<[1], [0], [0], [1], [0, 0, 1, 1], [], []>} : vector<16x8xf32>, vector<8x128xf32>, vector<16x128xf32> -> vector<16x128xf32>
    %c0_3 = arith.constant 0 : index
    %c0_4 = arith.constant 0 : index
    %3 = vector.load %arg3[%c0_3, %c0_4] : memref<16x1xf32, #tpu.memory_space<vmem>>, vector<16x1xf32>
    %4 = vector.broadcast %3 : vector<16x1xf32> to vector<16x128xf32>
    %5 = arith.addf %2, %4 : vector<16x128xf32>
    %cst_5 = arith.constant 0.000000e+00 : f32
    %6 = vector.broadcast %cst_5 : f32 to vector<16x128xf32>
    %7 = arith.maximumf %5, %6 : vector<16x128xf32>
    %c0_6 = arith.constant 0 : index
    %c0_7 = arith.constant 0 : index
    %8 = vector.load %arg4[%c0_6, %c0_7] : memref<2x16xf32, #tpu.memory_space<vmem>>, vector<2x16xf32>
    %cst_8 = arith.constant dense<0.000000e+00> : vector<2x128xf32>
    %9 = tpu.matmul %8, %7, %cst_8 {dimension_numbers = #tpu.dot_dimension_numbers<[1], [0], [0], [1], [0, 0, 1, 1], [], []>} : vector<2x16xf32>, vector<16x128xf32>, vector<2x128xf32> -> vector<2x128xf32>
    %c0_9 = arith.constant 0 : index
    %c0_10 = arith.constant 0 : index
    %10 = vector.load %arg5[%c0_9, %c0_10] : memref<2x1xf32, #tpu.memory_space<vmem>>, vector<2x1xf32>
    %11 = vector.broadcast %10 : vector<2x1xf32> to vector<2x128xf32>
    %12 = arith.addf %9, %11 : vector<2x128xf32>
    %c0_11 = arith.constant 0 : index
    %c0_12 = arith.constant 0 : index
    %13 = vector.load %arg6[%c0_11, %c0_12] : memref<2x128xf32, #tpu.memory_space<vmem>>, vector<2x128xf32>
    tpu.vector_store %arg6[%c0_11, %c0_12], %12 {strides = array<i32>} : memref<2x128xf32, #tpu.memory_space<vmem>>, vector<2x128xf32>,
    return
  }
  func.func @transform_0(%arg0: i32) -> (i32, i32) {
    %c0_i32 = arith.constant 0 : i32
    %c0_i32_0 = arith.constant 0 : i32
    return %c0_i32, %arg0 : i32, i32
  }
  func.func @transform_1(%arg0: i32) -> (i32, i32) {
    %c0_i32 = arith.constant 0 : i32
    %c0_i32_0 = arith.constant 0 : i32
    %c0_i32_1 = arith.constant 0 : i32
    return %c0_i32, %c0_i32_0 : i32, i32
  }
  func.func @transform_2(%arg0: i32) -> (i32, i32) {
    %c0_i32 = arith.constant 0 : i32
    %c0_i32_0 = arith.constant 0 : i32
    %c0_i32_1 = arith.constant 0 : i32
    return %c0_i32, %c0_i32_0 : i32, i32
  }
  func.func @transform_3(%arg0: i32) -> (i32, i32) {
    %c0_i32 = arith.constant 0 : i32
    %c0_i32_0 = arith.constant 0 : i32
    %c0_i32_1 = arith.constant 0 : i32
    return %c0_i32, %c0_i32_0 : i32, i32
  }
  func.func @transform_4(%arg0: i32) -> (i32, i32) {
    %c0_i32 = arith.constant 0 : i32
    %c0_i32_0 = arith.constant 0 : i32
    %c0_i32_1 = arith.constant 0 : i32
    return %c0_i32, %c0_i32_0 : i32, i32
  }
  func.func @transform_5(%arg0: i32) -> (i32, i32) {
    %c0_i32 = arith.constant 0 : i32
    %c0_i32_0 = arith.constant 0 : i32
    return %c0_i32, %arg0 : i32, i32
  }
}

</mosaic_0001>

<llo_original>
// kernel: tpu_custom_call.1
$region0: #{tpu_custom_call.1}
  #allocation0 [shape = 'u32[]', space=smem, size = 0x4, offset = 0x4, fixed_abs, tag = 'smem constant byte address 0x4 - core index']
  #allocation1 [shape = 'u32[144,128]{1,0:T(1,128)}', space=vmem, size = 0x12000, scoped, tag = 'internal scratch']
  %s0 = inlined_call_operand.vmem [shape: f32[8,128], index: 0, kind: input, shape index: {}]
  %s1 = inlined_call_operand.vmem [shape: f32[16,8], index: 1, kind: input, shape index: {}]
  %s2 = inlined_call_operand.vmem [shape: f32[16,1], index: 2, kind: input, shape index: {}]
  %s3 = inlined_call_operand.vmem [shape: f32[2,16], index: 3, kind: input, shape index: {}]
  %s4 = inlined_call_operand.vmem [shape: f32[2,1], index: 4, kind: input, shape index: {}]
  %s5 = inlined_call_operand.hbm [shape: f32[2,128], index: 5, kind: output, shape index: {}]
  %s6 = sld [smem:[#allocation0]]
  $region30: #{tpu_custom_call.1} parent=0
    _
  %s8 = ssub.s32 1, %s6
  %s9 = scalar_select 0, %s8, %s6
  $region1: #{tpu_custom_call.1} parent=0
    #allocation2 [shape = 'u8[1024]{0}', space=vmem, size = 0x400, scoped, tag = 'output window, operand 0, single buffered']
    #allocation3 [shape = 's32[1]{0}', space=sflag, size = 0x4, scoped, tag = 'scoped memory for tpu_custom_call.1']
    %10 = vsyncpa [#allocation3], 0
    // Predicated region
    $region2: #{tpu_custom_call.1} parent=1 // pred_check
      _
    $region3: #{tpu_custom_call.1} parent=1 // pred_check_branch
      %12 = sbr.rel (0) target = $region5
    $region4: #{tpu_custom_call.1} parent=1 // pred_region
      _
    $region5: #{tpu_custom_call.1} parent=1 // pred_fallthru
      _
    // Predicated region
    $region6: #{tpu_custom_call.1} parent=1 // pred_check
      _
    $region7: #{tpu_custom_call.1} parent=1 // pred_check_branch
      %14 = sbr.rel (0) target = $region9
    $region8: #{tpu_custom_call.1} parent=1 // pred_region
      _
    $region9: #{tpu_custom_call.1} parent=1 // pred_fallthru
      _
    // Predicated region
    $region10: #{tpu_custom_call.1} parent=1 // pred_check
      _
    $region11: #{tpu_custom_call.1} parent=1 // pred_check_branch
      %16 = sbr.rel (0) target = $region13
    $region12: #{tpu_custom_call.1} parent=1 // pred_region
      _
    $region13: #{tpu_custom_call.1} parent=1 // pred_fallthru
      _
    // Predicated region
    $region14: #{tpu_custom_call.1} parent=1 // pred_check
      _
    $region15: #{tpu_custom_call.1} parent=1 // pred_check_branch
      %18 = sbr.rel (0) target = $region17
    $region16: #{tpu_custom_call.1} parent=1 // pred_region
      _
    $region17: #{tpu_custom_call.1} parent=1 // pred_fallthru
      _
    // Predicated region
    $region18: #{tpu_custom_call.1} parent=1 // pred_check
      _
    $region19: #{tpu_custom_call.1} parent=1 // pred_check_branch
      %20 = sbr.rel (0) target = $region21
    $region20: #{tpu_custom_call.1} parent=1 // pred_region
      _
    $region21: #{tpu_custom_call.1} parent=1 // pred_fallthru
      _
    %v21 = vld [vmem:[%s1] sm:$0xff]
    %v22 = vld [vmem:[%s1 + $0x8] sm:$0xff]
    %v23 = vld [vmem:[%s0] sm:$0xff]
    %v24 = vld [vmem:[%s2] sm:$0xff]
    %v25 = vld [vmem:[%s2 + $0x8] sm:$0xff]
    %27 = vset.pattern.permute.xlu0 0
    %28 = vperm.xlu0 %27, %v24
    %v29 = vpop.permute.xlu0 %28
    %32 = vset.pattern.permute.xlu0 0
    %33 = vperm.xlu0 %32, %v25
    %v34 = vpop.permute.xlu0 %33
    %vm36 = vcmask 64512
    %v38 = vsel %vm36, %v21, 0
    %v41 = vsel %vm36, %v22, 0
    %43 = vmatprep.subr.mxu0 0.0
    %44 = vmatpush1.msra.mxu0 %v23
    %45 = vmatprep.subr.mxu0 0.0
    %46 = vmatpush1.msra.mxu0 0.0
    %47 = vmatprep.subr.mxu0 0.0
    %48 = vmatpush1.msra.mxu0 0.0
    %49 = vmatprep.subr.mxu0 0.0
    %50 = vmatpush1.msra.mxu0 0.0
    %51 = vmatprep.subr.mxu0 0.0
    %52 = vmatpush1.msra.mxu0 0.0
    %53 = vmatprep.subr.mxu0 0.0
    %54 = vmatpush1.msra.mxu0 0.0
    %55 = vmatprep.subr.mxu0 0.0
    %56 = vmatpush1.msra.mxu0 0.0
    %57 = vmatprep.subr.mxu0 0.0
    %58 = vmatpush1.msra.mxu0 0.0
    %59 = vmatprep.subr.mxu0 0.0
    %60 = vmatpush1.msra.mxu0 0.0
    %61 = vmatprep.subr.mxu0 0.0
    %62 = vmatpush1.msra.mxu0 0.0
    %63 = vmatprep.subr.mxu0 0.0
    %64 = vmatpush1.msra.mxu0 0.0
    %65 = vmatprep.subr.mxu0 0.0
    %66 = vmatpush1.msra.mxu0 0.0
    %67 = vmatprep.subr.mxu0 0.0
    %68 = vmatpush1.msra.mxu0 0.0
    %69 = vmatprep.subr.mxu0 0.0
    %70 = vmatpush1.msra.mxu0 0.0
    %71 = vmatprep.subr.mxu0 0.0
    %72 = vmatpush1.msra.mxu0 0.0
    %73 = vmatprep.subr.mxu0 0.0
    %74 = vmatpush1.msra.mxu0 0.0
    %75 = vmatprep.subr.mxu0 0.0
    %76 = vmatpush1.msra.mxu0 0.0
    %77 = vmatprep.subr.mxu0 0.0
    %78 = vmatpush1.msra.mxu0 0.0
    %79 = vmatprep.subr.mxu0 0.0
    %80 = vmatpush1.msra.mxu0 0.0
    %81 = vmatprep.subr.mxu0 0.0
    %82 = vmatpush1.msra.mxu0 0.0
    %83 = vmatprep.subr.mxu0 0.0
    %84 = vmatpush1.msra.mxu0 0.0
    %85 = vmatprep.subr.mxu0 0.0
    %86 = vmatpush1.msra.mxu0 0.0
    %87 = vmatprep.subr.mxu0 0.0
    %88 = vmatpush1.msra.mxu0 0.0
    %89 = vmatprep.subr.mxu0 0.0
    %90 = vmatpush1.msra.mxu0 0.0
    %91 = vmatprep.subr.mxu0 0.0
    %92 = vmatpush1.msra.mxu0 0.0
    %93 = vmatprep.subr.mxu0 0.0
    %94 = vmatpush1.msra.mxu0 0.0
    %95 = vmatprep.subr.mxu0 0.0
    %96 = vmatpush1.msra.mxu0 0.0
    %97 = vmatprep.subr.mxu0 0.0
    %98 = vmatpush1.msra.mxu0 0.0
    %99 = vmatprep.subr.mxu0 0.0
    %100 = vmatpush1.msra.mxu0 0.0
    %101 = vmatprep.subr.mxu0 0.0
    %102 = vmatpush1.msra.mxu0 0.0
    %103 = vmatprep.subr.mxu0 0.0
    %104 = vmatpush1.msra.mxu0 0.0
    %105 = vmatprep.subr.mxu0 0.0
    %106 = vmatpush1.msra.mxu0 0.0
    %107 = vmatprep.mubr.f32.mxu0 0.0
    %108 = vmatmul.mubr.f32.gmra.mrb[0].mxu0 %v38
    %v109 = vpop.f32.mrb[0].mxu0
    %v110 = vadd.f32 %v29, %v109
    %v111 = vpop.f32.mrb[0].mxu0
    %112 = vmatprep.mubr.f32.mxu0 0.0
    %113 = vmatmul.mubr.f32.gmra.mrb[0].mxu0 %v41
    %v114 = vpop.f32.mrb[0].mxu0
    %v115 = vadd.f32 %v34, %v114
    %v116 = vpop.f32.mrb[0].mxu0
    %117 = vdwg.mxu0
    %v118 = vmax.f32 %v110, 0.0
    %v119 = vmax.f32 %v115, 0.0
    %v120 = vld [vmem:[%s3] sm:$0x3]
    %v121 = vld [vmem:[%s4] sm:$0x3]
    %123 = vset.pattern.permute.xlu0 0
    %124 = vperm.xlu0 %123, %v121
    %v125 = vpop.permute.xlu0 %124
    %vm127 = vcmask 130048
    %v129 = vsel %vm127, %v120, 0
    %131 = vmatprep.subr.mxu0 0.0
    %132 = vmatpush1.msra.mxu0 %v118
    %133 = vmatprep.subr.mxu0 0.0
    %134 = vmatpush1.msra.mxu0 %v119
    %135 = vmatprep.subr.mxu0 0.0
    %136 = vmatpush1.msra.mxu0 0.0
    %137 = vmatprep.subr.mxu0 0.0
    %138 = vmatpush1.msra.mxu0 0.0
    %139 = vmatprep.subr.mxu0 0.0
    %140 = vmatpush1.msra.mxu0 0.0
    %141 = vmatprep.subr.mxu0 0.0
    %142 = vmatpush1.msra.mxu0 0.0
    %143 = vmatprep.subr.mxu0 0.0
    %144 = vmatpush1.msra.mxu0 0.0
    %145 = vmatprep.subr.mxu0 0.0
    %146 = vmatpush1.msra.mxu0 0.0
    %147 = vmatprep.subr.mxu0 0.0
    %148 = vmatpush1.msra.mxu0 0.0
    %149 = vmatprep.subr.mxu0 0.0
    %150 = vmatpush1.msra.mxu0 0.0
    %151 = vmatprep.subr.mxu0 0.0
    %152 = vmatpush1.msra.mxu0 0.0
    %153 = vmatprep.subr.mxu0 0.0
    %154 = vmatpush1.msra.mxu0 0.0
    %155 = vmatprep.subr.mxu0 0.0
    %156 = vmatpush1.msra.mxu0 0.0
    %157 = vmatprep.subr.mxu0 0.0
    %158 = vmatpush1.msra.mxu0 0.0
    %159 = vmatprep.subr.mxu0 0.0
    %160 = vmatpush1.msra.mxu0 0.0
    %161 = vmatprep.subr.mxu0 0.0
    %162 = vmatpush1.msra.mxu0 0.0
    %163 = vmatprep.subr.mxu0 0.0
    %164 = vmatpush1.msra.mxu0 0.0
    %165 = vmatprep.subr.mxu0 0.0
    %166 = vmatpush1.msra.mxu0 0.0
    %167 = vmatprep.subr.mxu0 0.0
    %168 = vmatpush1.msra.mxu0 0.0
    %169 = vmatprep.subr.mxu0 0.0
    %170 = vmatpush1.msra.mxu0 0.0
    %171 = vmatprep.subr.mxu0 0.0
    %172 = vmatpush1.msra.mxu0 0.0
    %173 = vmatprep.subr.mxu0 0.0
    %174 = vmatpush1.msra.mxu0 0.0
    %175 = vmatprep.subr.mxu0 0.0
    %176 = vmatpush1.msra.mxu0 0.0
    %177 = vmatprep.subr.mxu0 0.0
    %178 = vmatpush1.msra.mxu0 0.0
    %179 = vmatprep.subr.mxu0 0.0
    %180 = vmatpush1.msra.mxu0 0.0
    %181 = vmatprep.subr.mxu0 0.0
    %182 = vmatpush1.msra.mxu0 0.0
    %183 = vmatprep.subr.mxu0 0.0
    %184 = vmatpush1.msra.mxu0 0.0
    %185 = vmatprep.subr.mxu0 0.0
    %186 = vmatpush1.msra.mxu0 0.0
    %187 = vmatprep.subr.mxu0 0.0
    %188 = vmatpush1.msra.mxu0 0.0
    %189 = vmatprep.subr.mxu0 0.0
    %190 = vmatpush1.msra.mxu0 0.0
    %191 = vmatprep.subr.mxu0 0.0
    %192 = vmatpush1.msra.mxu0 0.0
    %193 = vmatprep.subr.mxu0 0.0
    %194 = vmatpush1.msra.mxu0 0.0
    %195 = vmatprep.mubr.f32.mxu0 0.0
    %196 = vmatmul.mubr.f32.gmra.mrb[0].mxu0 %v129
    %v197 = vpop.f32.mrb[0].mxu0
    %v198 = vadd.f32 %v125, %v197
    %v199 = vpop.f32.mrb[0].mxu0
    %200 = vdwg.mxu0
    %201 = vst [vmem:[#allocation2] sm:$0x3] %v198
    // Predicated region
    $region22: #{tpu_custom_call.1} parent=1 // pred_check
      _
    $region23: #{tpu_custom_call.1} parent=1 // pred_check_branch
      %203 = sbr.rel (0) target = $region25
    $region24: #{tpu_custom_call.1} parent=1 // pred_region
      %s205 = ssub.s32 32, 32
      %206 = vsyncadd [#allocation3], %s205
      %s208 = sshll.u32 [#allocation2], 4
      %s209 = int_to_ptr.vmem [resolvable:$true] %s208
      %211 = dma.vmem_to_hbm [thread:$0]  %s209, 32, %s5, [#allocation3]
    $region25: #{tpu_custom_call.1} parent=1 // pred_fallthru
      _
    // Predicated region
    $region26: #{tpu_custom_call.1} parent=1 // pred_check
      _
    $region27: #{tpu_custom_call.1} parent=1 // pred_check_branch
      %213 = sbr.rel (0) target = $region29
    $region28: #{tpu_custom_call.1} parent=1 // pred_region
      %214 = dma.done [#allocation3], 32
    $region29: #{tpu_custom_call.1} parent=1 // pred_fallthru
      _
    %215 = vsyncpa [#allocation3], 1

</llo_original>
